<compile_context>
chip_gen: v5e
topology: v5e:2x2
jax: 0.10.0
libtpu: 0.0.40
codegen_flags: <defaults>
</compile_context>

<pallas_src>
import jax
import jax.numpy as jnp
from jax import lax
from jax.experimental import pallas as pl
from jax.experimental.pallas import tpu as pltpu


# ---------------------------------------------------------------------------
# Kernel
# ---------------------------------------------------------------------------

def gcn_agg_kernel(xk_ref, a_ref, xi_ref, wlin_ref, wmem_ref, bias_ref, out_ref):
    """Fused GCN layer: on-the-fly projection, tiled A @ h, memory/bias/ReLU/L2 epilogue.

    grid = (num_row_tiles i, num_k_tiles k); out block (tm, DOUT_P) f32 is resident
    across k (same block index) and doubles as the accumulator.
    """
    k = pl.program_id(1)

    @pl.when(k == 0)
    def _init():
        out_ref[...] = jnp.zeros_like(out_ref)

    # On-the-fly projection for this k-tile: h = x[k-tile] @ W_lin  (bf16 MXU, f32 acc)
    h = jnp.dot(xk_ref[...], wlin_ref[...], preferred_element_type=jnp.float32)
    # Streamed contraction: out[i] += A[i, k-tile] @ h   (bf16 MXU, f32 accumulate)
    out_ref[...] += jnp.dot(a_ref[...], h.astype(jnp.bfloat16),
                            preferred_element_type=jnp.float32)

    @pl.when(k == pl.num_programs(1) - 1)
    def _finalize():
        # memory read values for this row tile (identity recipients), f32 epilogue
        mem = jnp.dot(xi_ref[...], wmem_ref[...], preferred_element_type=jnp.float32)
        mem = jnp.where(mem >= 0.0, mem, 0.01 * mem)           # leaky_relu(0.01)
        out = out_ref[...] + mem + bias_ref[...]
        out = jnp.maximum(out, 0.0)                            # post_layer ReLU
        # F.normalize(p=2, dim=1): out / max(||out||, 1e-12); padded lanes are 0
        sumsq = jnp.sum(out * out, axis=1, keepdims=True)
        inv = lax.rsqrt(jnp.maximum(sumsq, 1e-24))             # EUP, not VPU divide
        out_ref[...] = (out * inv).astype(out_ref.dtype)


# ---------------------------------------------------------------------------
# Tile plan + wrapper
# ---------------------------------------------------------------------------

def _round_up(a, b):
    return (a + b - 1) // b * b


def plan_tiles(n, dout):
    """Static tile plan (n_pad, tm, tk, dout_p); shared by glue and wrapper."""
    dout_p = _round_up(dout, 128)
    n_128 = _round_up(n, 128)
    if n_128 >= 4096:
        tm, tk = 512, 2048
    elif n_128 >= 2048:
        tm, tk = 512, 1024
    elif n_128 >= 1024:
        tm, tk = 512, 512
    elif n_128 >= 512:
        tm, tk = 256, 512
    elif n_128 >= 256:
        tm, tk = 128, 256
    else:
        tm, tk = 128, 128
    n_pad = _round_up(n_128, tk)          # tm | tk in every branch -> tm | n_pad
    # v7x megacore: prefer an even row-tile count so both TensorCores get work.
    if tm >= 256 and (n_pad // tm) % 2 == 1:
        tm //= 2
    return n_pad, tm, tk, dout_p


@jax.jit
def memory_gcn_conv3(x, a_norm, w_lin, w_mem, bias):
    n, din = x.shape
    dout = w_lin.shape[1]
    n_pad, tm, tk, dout_p = plan_tiles(n, dout)

    f32, bf16 = jnp.float32, jnp.bfloat16

    # bf16 node-feature stream (used both as the k-tile projection input and the
    # per-row-tile memory-read input); cheap to pad (N x DIN only).
    x_bf = jnp.zeros((n_pad, din), bf16).at[:n, :].set(x.astype(bf16))

    # Prefer an already-padded bf16 adjacency (built that way in gcn_norm_dense) so
    # we do not spend an extra N^2 read+write pass padding it here.
    if a_norm.shape == (n_pad, n_pad) and a_norm.dtype == bf16:
        a_bf = a_norm
    else:
        a_bf = jnp.zeros((n_pad, n_pad), bf16).at[
            :a_norm.shape[0], :a_norm.shape[1]].set(a_norm.astype(bf16))

    # Weights are tiny and resident: bf16 for native MXU rate; bias stays f32.
    wl_p = jnp.zeros((din, dout_p), bf16).at[:, :dout].set(w_lin.astype(bf16))
    wm_p = jnp.zeros((din, dout_p), bf16).at[:, :dout].set(w_mem.astype(bf16))
    b_p = jnp.zeros((1, dout_p), f32).at[:, :dout].set(bias.astype(f32))

    grid = (n_pad // tm, n_pad // tk)

    cost = pl.CostEstimate(
        flops=int(2 * n_pad * n_pad * dout_p                     # A @ h
                  + 2 * n_pad * din * dout_p * grid[0]           # on-the-fly projection
                  + 2 * n_pad * din * dout_p),                   # memory read
        transcendentals=int(n_pad),                              # per-row rsqrt
        bytes_accessed=int(n_pad * n_pad * 2                     # A (bf16)
                           + n_pad * din * 2 * (grid[0] + 1)     # x streams (bf16)
                           + n_pad * dout_p * 4                  # out (f32)
                           + 2 * din * dout_p * 2 + dout_p * 4)) # weights + bias

    out_p = pl.pallas_call(
        gcn_agg_kernel,
        out_shape=jax.ShapeDtypeStruct((n_pad, dout_p), f32),
        grid_spec=pltpu.PrefetchScalarGridSpec(
            num_scalar_prefetch=0,
            grid=grid,
            in_specs=[
                pl.BlockSpec((tk, din), lambda i, k: (k, 0)),       # x k-tile (streamed)
                pl.BlockSpec((tm, tk), lambda i, k: (i, k)),        # A tile (streamed)
                pl.BlockSpec((tm, din), lambda i, k: (i, 0)),       # x row tile (resident per i)
                pl.BlockSpec((din, dout_p), lambda i, k: (0, 0)),   # W_lin (resident)
                pl.BlockSpec((din, dout_p), lambda i, k: (0, 0)),   # W_mem (resident)
                pl.BlockSpec((1, dout_p), lambda i, k: (0, 0)),     # bias (resident)
            ],
            out_specs=pl.BlockSpec((tm, dout_p), lambda i, k: (i, 0)),
        ),
        compiler_params=pltpu.CompilerParams(
            dimension_semantics=("parallel", "arbitrary")),
        cost_estimate=cost,
    )(x_bf, a_bf, x_bf, wl_p, wm_p, b_p)

    out = out_p[:n, :dout]
    # synthetic next memory state (glue, not hot path): mean of z over the graph
    next_mem_state = jnp.mean(x, axis=0)
    return out, next_mem_state


# ---------------------------------------------------------------------------
# Glue + reference
# ---------------------------------------------------------------------------

def gcn_norm_dense(edge_index, num_nodes, num_nodes_pad=None, dtype=jnp.bfloat16):
    """Dense torch_geometric gcn_norm with self loops, built directly at padded size."""
    src, dst = edge_index[0], edge_index[1]
    loop = jnp.arange(num_nodes, dtype=src.dtype)
    src = jnp.concatenate([src, loop])
    dst = jnp.concatenate([dst, loop])
    w = jnp.ones(src.shape[0], jnp.float32)
    deg = jnp.zeros((num_nodes,), jnp.float32).at[dst].add(w)
    dinv = jnp.where(deg > 0, 1.0 / jnp.sqrt(deg), 0.0)
    norm = dinv[src] * w * dinv[dst]
    size = num_nodes if num_nodes_pad is None else num_nodes_pad
    # out[target] += norm * x[source]  ->  A[target, source] = norm
    a = jnp.zeros((size, size), jnp.float32).at[dst, src].add(norm)
    return a.astype(dtype)


def reference(x, a_norm_padded, w_lin, w_mem, bias):
    """Plain-JAX reference reproducing the kernel's bf16-input / f32-accumulate numerics."""
    f32, bf16 = jnp.float32, jnp.bfloat16
    hp = lax.Precision.HIGHEST
    n = x.shape[0]
    xq = x.astype(bf16).astype(f32)
    wlq = w_lin.astype(bf16).astype(f32)
    wmq = w_mem.astype(bf16).astype(f32)
    a = a_norm_padded.astype(f32)[:n, :n]
    h = jnp.dot(xq, wlq, precision=hp).astype(bf16).astype(f32)
    agg = jnp.dot(a, h, precision=hp)
    mem = jnp.dot(xq, wmq, precision=hp)
    mem = jnp.where(mem >= 0.0, mem, 0.01 * mem)
    out = jnp.maximum(agg + mem + bias.astype(f32), 0.0)
    nrm = jnp.sqrt(jnp.sum(out * out, axis=1, keepdims=True))
    return out / jnp.maximum(nrm, 1e-12)


if __name__ == "__main__":
    N, DIN, DOUT, E = 16, 8, 32, 40

    key = jax.random.PRNGKey(0)
    kx, ke1, ke2, kw1, kw2, kb = jax.random.split(key, 6)

    x = jax.random.normal(kx, (N, DIN), jnp.float32)
    edge_index = jnp.stack([
        jax.random.randint(ke1, (E,), 0, N),
        jax.random.randint(ke2, (E,), 0, N),
    ])

    # Build the normalized adjacency already padded + bf16 (avoids wrapper pad pass).
    n_pad, _, _, _ = plan_tiles(N, DOUT)
    a_norm = gcn_norm_dense(edge_index, N, num_nodes_pad=n_pad)

    # deterministic parameter init (glorot-ish scale)
    w_lin = jax.random.normal(kw1, (DIN, DOUT), jnp.float32) * (1.0 / jnp.sqrt(DIN))
    w_mem = jax.random.normal(kw2, (DIN, DOUT), jnp.float32) * (1.0 / jnp.sqrt(DIN))
    bias = jax.random.normal(kb, (1, DOUT), jnp.float32) * 0.1

    out, mem_state = memory_gcn_conv3(x, a_norm, w_lin, w_mem, bias)
    jax.block_until_ready(out)
    jax.block_until_ready(mem_state)

    ref = reference(x, a_norm, w_lin, w_mem, bias)
    assert out.shape == (N, DOUT)
    assert jnp.allclose(out, ref, atol=1e-3, rtol=1e-3), "mismatch vs reference"

    print("KERNEL_OK")
</pallas_src>

<mosaic_0001>
module attributes {stable_mosaic.version = 11 : i64} {
  func.func @gcn_agg_kernel(%arg0: i32, %arg1: i32, %arg2: memref<128x8xbf16, #tpu.memory_space<vmem>>, %arg3: memref<128x128xbf16, #tpu.memory_space<vmem>>, %arg4: memref<128x8xbf16, #tpu.memory_space<vmem>>, %arg5: memref<8x128xbf16, #tpu.memory_space<vmem>>, %arg6: memref<8x128xbf16, #tpu.memory_space<vmem>>, %arg7: memref<1x128xf32, #tpu.memory_space<vmem>>, %arg8: memref<128x128xf32, #tpu.memory_space<vmem>>) attributes {dimension_semantics = [#tpu.dimension_semantics<parallel>, #tpu.dimension_semantics<arbitrary>], iteration_bounds = array<i64: 1, 1>, scalar_prefetch = 0 : i64, scratch_operands = 0 : i64, tpu.core_type = #tpu.core_type<tc>, window_params = [{transform_indices = @transform_0, window_bounds = array<i64: 128, 8>}, {transform_indices = @transform_1, window_bounds = array<i64: 128, 128>}, {transform_indices = @transform_2, window_bounds = array<i64: 128, 8>}, {pipeline_mode = #tpu.pipeline_mode<synchronous>, transform_indices = @transform_3, window_bounds = array<i64: 8, 128>}, {pipeline_mode = #tpu.pipeline_mode<synchronous>, transform_indices = @transform_4, window_bounds = array<i64: 8, 128>}, {pipeline_mode = #tpu.pipeline_mode<synchronous>, transform_indices = @transform_5, window_bounds = array<i64: 1, 128>}, {transform_indices = @transform_6, window_bounds = array<i64: 128, 128>}]} {
    %c0_i32 = arith.constant 0 : i32
    %0 = arith.cmpi eq, %arg1, %c0_i32 : i32
    %1 = arith.extui %0 : i1 to i32
    %c0_i32_0 = arith.constant 0 : i32
    %2 = arith.cmpi ne, %1, %c0_i32_0 : i32
    scf.if %2 {
      %cst_13 = arith.constant 0.000000e+00 : f32
      %15 = vector.broadcast %cst_13 : f32 to vector<128x128xf32>
      %c0_14 = arith.constant 0 : index
      %c0_15 = arith.constant 0 : index
      %16 = vector.load %arg8[%c0_14, %c0_15] : memref<128x128xf32, #tpu.memory_space<vmem>>, vector<128x128xf32>
      tpu.vector_store %arg8[%c0_14, %c0_15], %15 {strides = array<i32>} : memref<128x128xf32, #tpu.memory_space<vmem>>, vector<128x128xf32>,
    } else {
    }
    %c0 = arith.constant 0 : index
    %c0_1 = arith.constant 0 : index
    %3 = vector.load %arg2[%c0, %c0_1] : memref<128x8xbf16, #tpu.memory_space<vmem>>, vector<128x8xbf16>
    %c0_2 = arith.constant 0 : index
    %c0_3 = arith.constant 0 : index
    %4 = vector.load %arg5[%c0_2, %c0_3] : memref<8x128xbf16, #tpu.memory_space<vmem>>, vector<8x128xbf16>
    %cst = arith.constant dense<0.000000e+00> : vector<128x128xf32>
    %5 = tpu.matmul %3, %4, %cst {dimension_numbers = #tpu.dot_dimension_numbers<[1], [0], [0], [1], [0, 0, 1, 1], [], []>} : vector<128x8xbf16>, vector<8x128xbf16>, vector<128x128xf32> -> vector<128x128xf32>
    %c0_4 = arith.constant 0 : index
    %c0_5 = arith.constant 0 : index
    %6 = vector.load %arg8[%c0_4, %c0_5] : memref<128x128xf32, #tpu.memory_space<vmem>>, vector<128x128xf32>
    %c0_6 = arith.constant 0 : index
    %c0_7 = arith.constant 0 : index
    %7 = vector.load %arg3[%c0_6, %c0_7] : memref<128x128xbf16, #tpu.memory_space<vmem>>, vector<128x128xbf16>
    %8 = arith.truncf %5 : vector<128x128xf32> to vector<128x128xbf16>
    %cst_8 = arith.constant dense<0.000000e+00> : vector<128x128xf32>
    %9 = tpu.matmul %7, %8, %cst_8 {dimension_numbers = #tpu.dot_dimension_numbers<[1], [0], [0], [1], [0, 0, 1, 1], [], []>} : vector<128x128xbf16>, vector<128x128xbf16>, vector<128x128xf32> -> vector<128x128xf32>
    %10 = arith.addf %6, %9 : vector<128x128xf32>
    %c0_9 = arith.constant 0 : index
    %c0_10 = arith.constant 0 : index
    %11 = vector.load %arg8[%c0_9, %c0_10] : memref<128x128xf32, #tpu.memory_space<vmem>>, vector<128x128xf32>
    tpu.vector_store %arg8[%c0_9, %c0_10], %10 {strides = array<i32>} : memref<128x128xf32, #tpu.memory_space<vmem>>, vector<128x128xf32>,
    %c0_i32_11 = arith.constant 0 : i32
    %12 = arith.cmpi eq, %arg1, %c0_i32_11 : i32
    %13 = arith.extui %12 : i1 to i32
    %c0_i32_12 = arith.constant 0 : i32
    %14 = arith.cmpi ne, %13, %c0_i32_12 : i32
    scf.if %14 {
      %c0_13 = arith.constant 0 : index
      %c0_14 = arith.constant 0 : index
      %15 = vector.load %arg4[%c0_13, %c0_14] : memref<128x8xbf16, #tpu.memory_space<vmem>>, vector<128x8xbf16>
      %c0_15 = arith.constant 0 : index
      %c0_16 = arith.constant 0 : index
      %16 = vector.load %arg6[%c0_15, %c0_16] : memref<8x128xbf16, #tpu.memory_space<vmem>>, vector<8x128xbf16>
      %cst_17 = arith.constant dense<0.000000e+00> : vector<128x128xf32>
      %17 = tpu.matmul %15, %16, %cst_17 {dimension_numbers = #tpu.dot_dimension_numbers<[1], [0], [0], [1], [0, 0, 1, 1], [], []>} : vector<128x8xbf16>, vector<8x128xbf16>, vector<128x128xf32> -> vector<128x128xf32>
      %cst_18 = arith.constant 0.000000e+00 : f32
      %18 = vector.broadcast %cst_18 : f32 to vector<128x128xf32>
      %19 = arith.cmpf oge, %17, %18 : vector<128x128xf32>
      %cst_19 = arith.constant 0.00999999977 : f32
      %20 = vector.broadcast %cst_19 : f32 to vector<128x128xf32>
      %21 = arith.mulf %20, %17 : vector<128x128xf32>
      %22 = arith.select %19, %17, %21 : vector<128x128xi1>, vector<128x128xf32>
      %c0_20 = arith.constant 0 : index
      %c0_21 = arith.constant 0 : index
      %23 = vector.load %arg8[%c0_20, %c0_21] : memref<128x128xf32, #tpu.memory_space<vmem>>, vector<128x128xf32>
      %24 = arith.addf %23, %22 : vector<128x128xf32>
      %c0_22 = arith.constant 0 : index
      %c0_23 = arith.constant 0 : index
      %25 = vector.load %arg7[%c0_22, %c0_23] : memref<1x128xf32, #tpu.memory_space<vmem>>, vector<1x128xf32>
      %26 = vector.broadcast %25 : vector<1x128xf32> to vector<128x128xf32>
      %27 = arith.addf %24, %26 : vector<128x128xf32>
      %cst_24 = arith.constant 0.000000e+00 : f32
      %28 = vector.broadcast %cst_24 : f32 to vector<128x128xf32>
      %29 = arith.maximumf %27, %28 : vector<128x128xf32>
      %30 = arith.mulf %29, %29 : vector<128x128xf32>
      %cst_25 = arith.constant dense<0.000000e+00> : vector<128xf32>
      %31 = vector.multi_reduction <add>, %30, %cst_25 [1] : vector<128x128xf32> to vector<128xf32>
      %32 = vector.shape_cast %31 : vector<128xf32> to vector<128x1xf32>
      %cst_26 = arith.constant 1.000000e-24 : f32
      %33 = vector.broadcast %cst_26 : f32 to vector<128x1xf32>
      %34 = arith.maximumf %32, %33 : vector<128x1xf32>
      %35 = math.rsqrt %34 : vector<128x1xf32>
      %36 = vector.broadcast %35 : vector<128x1xf32> to vector<128x128xf32>
      %37 = arith.mulf %29, %36 : vector<128x128xf32>
      %c0_27 = arith.constant 0 : index
      %c0_28 = arith.constant 0 : index
      %38 = vector.load %arg8[%c0_27, %c0_28] : memref<128x128xf32, #tpu.memory_space<vmem>>, vector<128x128xf32>
      tpu.vector_store %arg8[%c0_27, %c0_28], %37 {strides = array<i32>} : memref<128x128xf32, #tpu.memory_space<vmem>>, vector<128x128xf32>,
    } else {
    }
    return
  }
  func.func @transform_0(%arg0: i32, %arg1: i32) -> (i32, i32) {
    %c0_i32 = arith.constant 0 : i32
    %c0_i32_0 = arith.constant 0 : i32
    return %arg1, %c0_i32 : i32, i32
  }
  func.func @transform_1(%arg0: i32, %arg1: i32) -> (i32, i32) {
    %c0_i32 = arith.constant 0 : i32
    return %arg0, %arg1 : i32, i32
  }
  func.func @transform_2(%arg0: i32, %arg1: i32) -> (i32, i32) {
    %c0_i32 = arith.constant 0 : i32
    %c0_i32_0 = arith.constant 0 : i32
    return %arg0, %c0_i32 : i32, i32
  }
  func.func @transform_3(%arg0: i32, %arg1: i32) -> (i32, i32) {
    %c0_i32 = arith.constant 0 : i32
    %c0_i32_0 = arith.constant 0 : i32
    %c0_i32_1 = arith.constant 0 : i32
    return %c0_i32, %c0_i32_0 : i32, i32
  }
  func.func @transform_4(%arg0: i32, %arg1: i32) -> (i32, i32) {
    %c0_i32 = arith.constant 0 : i32
    %c0_i32_0 = arith.constant 0 : i32
    %c0_i32_1 = arith.constant 0 : i32
    return %c0_i32, %c0_i32_0 : i32, i32
  }
  func.func @transform_5(%arg0: i32, %arg1: i32) -> (i32, i32) {
    %c0_i32 = arith.constant 0 : i32
    %c0_i32_0 = arith.constant 0 : i32
    %c0_i32_1 = arith.constant 0 : i32
    return %c0_i32, %c0_i32_0 : i32, i32
  }
  func.func @transform_6(%arg0: i32, %arg1: i32) -> (i32, i32) {
    %c0_i32 = arith.constant 0 : i32
    %c0_i32_0 = arith.constant 0 : i32
    return %arg0, %c0_i32 : i32, i32
  }
}

</mosaic_0001>

<llo_original>
// kernel: memory_gcn_conv3.1
$region0: #{memory_gcn_conv3.1}
  #allocation0 [shape = 'u32[]', space=smem, size = 0x4, offset = 0x4, fixed_abs, tag = 'smem constant byte address 0x4 - core index']
  #allocation1 [shape = 'u32[72,128]{1,0:T(1,128)}', space=vmem, size = 0x9000, scoped, tag = 'internal scratch']
  %s0 = inlined_call_operand.vmem [shape: bf16[128,8], index: 0, kind: input, shape index: {}, may-alias: {0,2}]
  %s1 = inlined_call_operand.vmem [shape: bf16[128,128], index: 1, kind: input, shape index: {}]
  %s2 = inlined_call_operand.vmem [shape: bf16[128,8], index: 2, kind: input, shape index: {}, may-alias: {0,2}]
  %s3 = inlined_call_operand.vmem [shape: bf16[8,128], index: 3, kind: input, shape index: {}]
  %s4 = inlined_call_operand.vmem [shape: bf16[8,128], index: 4, kind: input, shape index: {}]
  %s5 = inlined_call_operand.vmem [shape: f32[1,128], index: 5, kind: input, shape index: {}]
  %s6 = inlined_call_operand.vmem [shape: f32[128,128], index: 6, kind: output, shape index: {}]
  %s7 = sld [smem:[#allocation0]]
  $region42: #{memory_gcn_conv3.1} parent=0
    _
  %s9 = ssub.s32 1, %s7
  %s10 = scalar_select 0, %s9, %s7
  // Predicated region
  $region2: #{memory_gcn_conv3.1} parent=0 // pred_check
    _
  $region3: #{memory_gcn_conv3.1} parent=0 // pred_check_branch
    %12 = sbr.rel (0) target = $region5
  $region4: #{memory_gcn_conv3.1} parent=0 // pred_region
    _
  $region5: #{memory_gcn_conv3.1} parent=0 // pred_fallthru
    _
  // Predicated region
  $region6: #{memory_gcn_conv3.1} parent=0 // pred_check
    _
  $region7: #{memory_gcn_conv3.1} parent=0 // pred_check_branch
    %14 = sbr.rel (0) target = $region9
  $region8: #{memory_gcn_conv3.1} parent=0 // pred_region
    _
  $region9: #{memory_gcn_conv3.1} parent=0 // pred_fallthru
    _
  // Predicated region
  $region10: #{memory_gcn_conv3.1} parent=0 // pred_check
    _
  $region11: #{memory_gcn_conv3.1} parent=0 // pred_check_branch
    %16 = sbr.rel (0) target = $region13
  $region12: #{memory_gcn_conv3.1} parent=0 // pred_region
    _
  $region13: #{memory_gcn_conv3.1} parent=0 // pred_fallthru
    _
  // Predicated region
  $region14: #{memory_gcn_conv3.1} parent=0 // pred_check
    _
  $region15: #{memory_gcn_conv3.1} parent=0 // pred_check_branch
    %18 = sbr.rel (0) target = $region17
  $region16: #{memory_gcn_conv3.1} parent=0 // pred_region
    _
  $region17: #{memory_gcn_conv3.1} parent=0 // pred_fallthru
    _
  // Predicated region
  $region18: #{memory_gcn_conv3.1} parent=0 // pred_check
    _
  $region19: #{memory_gcn_conv3.1} parent=0 // pred_check_branch
    %20 = sbr.rel (0) target = $region21
  $region20: #{memory_gcn_conv3.1} parent=0 // pred_region
    _
  $region21: #{memory_gcn_conv3.1} parent=0 // pred_fallthru
    _
  // Predicated region
  $region22: #{memory_gcn_conv3.1} parent=0 // pred_check
    _
  $region23: #{memory_gcn_conv3.1} parent=0 // pred_check_branch
    %22 = sbr.rel (0) target = $region25
  $region24: #{memory_gcn_conv3.1} parent=0 // pred_region
    _
  $region25: #{memory_gcn_conv3.1} parent=0 // pred_fallthru
    _
  %p24 = scmp.eq.s32.totalorder 0, 0
  // Predicated region
  $region26: #{memory_gcn_conv3.1} parent=0 // pred_check
    %p25 = pneg %p24
  $region27: #{memory_gcn_conv3.1} parent=0 // pred_check_branch
    %27 = sbr.rel (%p25) target = $region29
  $region28: #{memory_gcn_conv3.1} parent=0 // pred_region
    %28 = vst [vmem:[%s6] sm:$0xff] 0.0
    %29 = vst [vmem:[%s6 + $0x8] sm:$0xff] 0.0
    %30 = vst [vmem:[%s6 + $0x10] sm:$0xff] 0.0
    %31 = vst [vmem:[%s6 + $0x18] sm:$0xff] 0.0
    %32 = vst [vmem:[%s6 + $0x20] sm:$0xff] 0.0
    %33 = vst [vmem:[%s6 + $0x28] sm:$0xff] 0.0
    %34 = vst [vmem:[%s6 + $0x30] sm:$0xff] 0.0
    %35 = vst [vmem:[%s6 + $0x38] sm:$0xff] 0.0
    %36 = vst [vmem:[%s6 + $0x40] sm:$0xff] 0.0
    %37 = vst [vmem:[%s6 + $0x48] sm:$0xff] 0.0
    %38 = vst [vmem:[%s6 + $0x50] sm:$0xff] 0.0
    %39 = vst [vmem:[%s6 + $0x58] sm:$0xff] 0.0
    %40 = vst [vmem:[%s6 + $0x60] sm:$0xff] 0.0
    %41 = vst [vmem:[%s6 + $0x68] sm:$0xff] 0.0
    %42 = vst [vmem:[%s6 + $0x70] sm:$0xff] 0.0
    %43 = vst [vmem:[%s6 + $0x78] sm:$0xff] 0.0
  $region29: #{memory_gcn_conv3.1} parent=0 // pred_fallthru
    _
  %v44 = vld [vmem:[%s0] sm:$0xf]
  %v45 = vld [vmem:[%s0 + $0x4] sm:$0xf]
  %v46 = vld [vmem:[%s0 + $0x8] sm:$0xf]
  %v47 = vld [vmem:[%s0 + $0xc] sm:$0xf]
  %v48 = vld [vmem:[%s0 + $0x10] sm:$0xf]
  %v49 = vld [vmem:[%s0 + $0x14] sm:$0xf]
  %v50 = vld [vmem:[%s0 + $0x18] sm:$0xf]
  %v51 = vld [vmem:[%s0 + $0x1c] sm:$0xf]
  %v52 = vld [vmem:[%s0 + $0x20] sm:$0xf]
  %v53 = vld [vmem:[%s0 + $0x24] sm:$0xf]
  %v54 = vld [vmem:[%s0 + $0x28] sm:$0xf]
  %v55 = vld [vmem:[%s0 + $0x2c] sm:$0xf]
  %v56 = vld [vmem:[%s0 + $0x30] sm:$0xf]
  %v57 = vld [vmem:[%s0 + $0x34] sm:$0xf]
  %v58 = vld [vmem:[%s0 + $0x38] sm:$0xf]
  %v59 = vld [vmem:[%s0 + $0x3c] sm:$0xf]
  %v60 = vld [vmem:[%s3] sm:$0xf]
  %v77 = vunpack.c.l.b16 %v44
  %v78 = vunpack.c.l.b16 %v45
  %v79 = vunpack.c.l.b16 %v46
  %v80 = vunpack.c.l.b16 %v47
  %v81 = vunpack.c.l.b16 %v48
  %v82 = vunpack.c.l.b16 %v49
  %v83 = vunpack.c.l.b16 %v50
  %v84 = vunpack.c.l.b16 %v51
  %v85 = vunpack.c.l.b16 %v52
  %v86 = vunpack.c.l.b16 %v53
  %v87 = vunpack.c.l.b16 %v54
  %v88 = vunpack.c.l.b16 %v55
  %v89 = vunpack.c.l.b16 %v56
  %v90 = vunpack.c.l.b16 %v57
  %v91 = vunpack.c.l.b16 %v58
  %v92 = vunpack.c.l.b16 %v59
  %v93 = vpack.c.b16 %v78, %v77
  %v94 = vpack.c.b16 %v80, %v79
  %v95 = vpack.c.b16 %v82, %v81
  %v96 = vpack.c.b16 %v84, %v83
  %v97 = vpack.c.b16 %v86, %v85
  %v98 = vpack.c.b16 %v88, %v87
  %v99 = vpack.c.b16 %v90, %v89
  %v100 = vpack.c.b16 %v92, %v91
  %vm101 = vcmask 64512
  %v103 = vsel %vm101, %v93, 0
  %v106 = vsel %vm101, %v94, 0
  %v109 = vsel %vm101, %v95, 0
  %v112 = vsel %vm101, %v96, 0
  %v115 = vsel %vm101, %v97, 0
  %v118 = vsel %vm101, %v98, 0
  %v121 = vsel %vm101, %v99, 0
  %v124 = vsel %vm101, %v100, 0
  %vm126 = vcmask 1043456
  %v128 = vsel %vm126, %v60, 0
  %130 = vmatpush.bf16.msra.mxu0 0
  %131 = vmatpush.bf16.msra.mxu0 0
  %132 = vmatpush.bf16.msra.mxu0 0
  %133 = vmatpush.bf16.msra.mxu0 0
  %134 = vmatpush.bf16.msra.mxu0 0
  %135 = vmatpush.bf16.msra.mxu0 0
  %136 = vmatpush.bf16.msra.mxu0 0
  %137 = vmatpush.bf16.msra.mxu0 %v128
  %138 = vmatmul.bf16.gmra.mxu0 %v103
  %v139 = vpop.f32.mrf.mxu0
  %v140 = vadd.f32 0.0, %v139
  %v141 = vpop.f32.mrf.mxu0
  %v142 = vadd.f32 0.0, %v141
  %143 = vmatmul.bf16.gmra.mxu0 %v106
  %v144 = vpop.f32.mrf.mxu0
  %v145 = vadd.f32 0.0, %v144
  %v146 = vpop.f32.mrf.mxu0
  %v147 = vadd.f32 0.0, %v146
  %148 = vmatmul.bf16.gmra.mxu0 %v109
  %v149 = vpop.f32.mrf.mxu0
  %v150 = vadd.f32 0.0, %v149
  %v151 = vpop.f32.mrf.mxu0
  %v152 = vadd.f32 0.0, %v151
  %153 = vmatmul.bf16.gmra.mxu0 %v112
  %v154 = vpop.f32.mrf.mxu0
  %v155 = vadd.f32 0.0, %v154
  %v156 = vpop.f32.mrf.mxu0
  %v157 = vadd.f32 0.0, %v156
  %158 = vmatmul.bf16.gmra.mxu0 %v115
  %v159 = vpop.f32.mrf.mxu0
  %v160 = vadd.f32 0.0, %v159
  %v161 = vpop.f32.mrf.mxu0
  %v162 = vadd.f32 0.0, %v161
  %163 = vmatmul.bf16.gmra.mxu0 %v118
  %v164 = vpop.f32.mrf.mxu0
  %v165 = vadd.f32 0.0, %v164
  %v166 = vpop.f32.mrf.mxu0
  %v167 = vadd.f32 0.0, %v166
  %168 = vmatmul.bf16.gmra.mxu0 %v121
  %v169 = vpop.f32.mrf.mxu0
  %v170 = vadd.f32 0.0, %v169
  %v171 = vpop.f32.mrf.mxu0
  %v172 = vadd.f32 0.0, %v171
  %173 = vmatmul.bf16.gmra.mxu0 %v124
  %v174 = vpop.f32.mrf.mxu0
  %v175 = vadd.f32 0.0, %v174
  %v176 = vpop.f32.mrf.mxu0
  %v177 = vadd.f32 0.0, %v176
  %178 = vdwg.mxu0
  %v179 = vld [vmem:[%s6] sm:$0xff]
  %v180 = vld [vmem:[%s6 + $0x8] sm:$0xff]
  %v181 = vld [vmem:[%s6 + $0x10] sm:$0xff]
  %v182 = vld [vmem:[%s6 + $0x18] sm:$0xff]
  %v183 = vld [vmem:[%s6 + $0x20] sm:$0xff]
  %v184 = vld [vmem:[%s6 + $0x28] sm:$0xff]
  %v185 = vld [vmem:[%s6 + $0x30] sm:$0xff]
  %v186 = vld [vmem:[%s6 + $0x38] sm:$0xff]
  %v187 = vld [vmem:[%s6 + $0x40] sm:$0xff]
  %v188 = vld [vmem:[%s6 + $0x48] sm:$0xff]
  %v189 = vld [vmem:[%s6 + $0x50] sm:$0xff]
  %v190 = vld [vmem:[%s6 + $0x58] sm:$0xff]
  %v191 = vld [vmem:[%s6 + $0x60] sm:$0xff]
  %v192 = vld [vmem:[%s6 + $0x68] sm:$0xff]
  %v193 = vld [vmem:[%s6 + $0x70] sm:$0xff]
  %v194 = vld [vmem:[%s6 + $0x78] sm:$0xff]
  %v195 = vld [vmem:[%s1] sm:$0xf]
  %v196 = vld [vmem:[%s1 + $0x4] sm:$0xf]
  %v197 = vld [vmem:[%s1 + $0x8] sm:$0xf]
  %v198 = vld [vmem:[%s1 + $0xc] sm:$0xf]
  %v199 = vld [vmem:[%s1 + $0x10] sm:$0xf]
  %v200 = vld [vmem:[%s1 + $0x14] sm:$0xf]
  %v201 = vld [vmem:[%s1 + $0x18] sm:$0xf]
  %v202 = vld [vmem:[%s1 + $0x1c] sm:$0xf]
  %v203 = vld [vmem:[%s1 + $0x20] sm:$0xf]
  %v204 = vld [vmem:[%s1 + $0x24] sm:$0xf]
  %v205 = vld [vmem:[%s1 + $0x28] sm:$0xf]
  %v206 = vld [vmem:[%s1 + $0x2c] sm:$0xf]
  %v207 = vld [vmem:[%s1 + $0x30] sm:$0xf]
  %v208 = vld [vmem:[%s1 + $0x34] sm:$0xf]
  %v209 = vld [vmem:[%s1 + $0x38] sm:$0xf]
  %v210 = vld [vmem:[%s1 + $0x3c] sm:$0xf]
  %v211 = vpack.c.bf16 %v142, %v140
  %v212 = vpack.c.bf16 %v147, %v145
  %v213 = vpack.c.bf16 %v152, %v150
  %v214 = vpack.c.bf16 %v157, %v155
  %v215 = vpack.c.bf16 %v162, %v160
  %v216 = vpack.c.bf16 %v167, %v165
  %v217 = vpack.c.bf16 %v172, %v170
  %v218 = vpack.c.bf16 %v177, %v175
  %v235 = vunpack.c.l.b16 %v195
  %v236 = vunpack.c.l.b16 %v196
  %v237 = vunpack.c.l.b16 %v197
  %v238 = vunpack.c.l.b16 %v198
  %v239 = vunpack.c.l.b16 %v199
  %v240 = vunpack.c.l.b16 %v200
  %v241 = vunpack.c.l.b16 %v201
  %v242 = vunpack.c.l.b16 %v202
  %v243 = vunpack.c.l.b16 %v203
  %v244 = vunpack.c.l.b16 %v204
  %v245 = vunpack.c.l.b16 %v205
  %v246 = vunpack.c.l.b16 %v206
  %v247 = vunpack.c.l.b16 %v207
  %v248 = vunpack.c.l.b16 %v208
  %v249 = vunpack.c.l.b16 %v209
  %v250 = vunpack.c.l.b16 %v210
  %v251 = vpack.c.b16 %v236, %v235
  %v252 = vpack.c.b16 %v238, %v237
  %v253 = vpack.c.b16 %v240, %v239
  %v254 = vpack.c.b16 %v242, %v241
  %v255 = vpack.c.b16 %v244, %v243
  %v256 = vpack.c.b16 %v246, %v245
  %v257 = vpack.c.b16 %v248, %v247
  %v258 = vpack.c.b16 %v250, %v249
  %267 = vmatpush.bf16.msra.mxu0 %v218
  %268 = vmatpush.bf16.msra.mxu0 %v217
  %269 = vmatpush.bf16.msra.mxu0 %v216
  %270 = vmatpush.bf16.msra.mxu0 %v215
  %271 = vmatpush.bf16.msra.mxu0 %v214
  %272 = vmatpush.bf16.msra.mxu0 %v213
  %273 = vmatpush.bf16.msra.mxu0 %v212
  %274 = vmatpush.bf16.msra.mxu0 %v211
  %275 = vmatmul.bf16.gmra.mxu0 %v251
  %v276 = vpop.f32.mrf.mxu0
  %v277 = vadd.f32 0.0, %v276
  %v278 = vpop.f32.mrf.mxu0
  %v279 = vadd.f32 0.0, %v278
  %280 = vmatmul.bf16.gmra.mxu0 %v252
  %v281 = vpop.f32.mrf.mxu0
  %v282 = vadd.f32 0.0, %v281
  %v283 = vpop.f32.mrf.mxu0
  %v284 = vadd.f32 0.0, %v283
  %285 = vmatmul.bf16.gmra.mxu0 %v253
  %v286 = vpop.f32.mrf.mxu0
  %v287 = vadd.f32 0.0, %v286
  %v288 = vpop.f32.mrf.mxu0
  %v289 = vadd.f32 0.0, %v288
  %290 = vmatmul.bf16.gmra.mxu0 %v254
  %v291 = vpop.f32.mrf.mxu0
  %v292 = vadd.f32 0.0, %v291
  %v293 = vpop.f32.mrf.mxu0
  %v294 = vadd.f32 0.0, %v293
  %295 = vmatmul.bf16.gmra.mxu0 %v255
  %v296 = vpop.f32.mrf.mxu0
  %v297 = vadd.f32 0.0, %v296
  %v298 = vpop.f32.mrf.mxu0
  %v299 = vadd.f32 0.0, %v298
  %300 = vmatmul.bf16.gmra.mxu0 %v256
  %v301 = vpop.f32.mrf.mxu0
  %v302 = vadd.f32 0.0, %v301
  %v303 = vpop.f32.mrf.mxu0
  %v304 = vadd.f32 0.0, %v303
  %305 = vmatmul.bf16.gmra.mxu0 %v257
  %v306 = vpop.f32.mrf.mxu0
  %v307 = vadd.f32 0.0, %v306
  %v308 = vpop.f32.mrf.mxu0
  %v309 = vadd.f32 0.0, %v308
  %310 = vmatmul.bf16.gmra.mxu0 %v258
  %v311 = vpop.f32.mrf.mxu0
  %v312 = vadd.f32 0.0, %v311
  %v313 = vpop.f32.mrf.mxu0
  %v314 = vadd.f32 0.0, %v313
  %315 = vdwg.mxu0
  %v316 = vadd.f32 %v179, %v277
  %v317 = vadd.f32 %v180, %v279
  %v318 = vadd.f32 %v181, %v282
  %v319 = vadd.f32 %v182, %v284
  %v320 = vadd.f32 %v183, %v287
  %v321 = vadd.f32 %v184, %v289
  %v322 = vadd.f32 %v185, %v292
  %v323 = vadd.f32 %v186, %v294
  %v324 = vadd.f32 %v187, %v297
  %v325 = vadd.f32 %v188, %v299
  %v326 = vadd.f32 %v189, %v302
  %v327 = vadd.f32 %v190, %v304
  %v328 = vadd.f32 %v191, %v307
  %v329 = vadd.f32 %v192, %v309
  %v330 = vadd.f32 %v193, %v312
  %v331 = vadd.f32 %v194, %v314
  %332 = vst [vmem:[%s6] sm:$0xff] %v316
  %333 = vst [vmem:[%s6 + $0x8] sm:$0xff] %v317
  %334 = vst [vmem:[%s6 + $0x10] sm:$0xff] %v318
  %335 = vst [vmem:[%s6 + $0x18] sm:$0xff] %v319
  %336 = vst [vmem:[%s6 + $0x20] sm:$0xff] %v320
  %337 = vst [vmem:[%s6 + $0x28] sm:$0xff] %v321
  %338 = vst [vmem:[%s6 + $0x30] sm:$0xff] %v322
  %339 = vst [vmem:[%s6 + $0x38] sm:$0xff] %v323
  %340 = vst [vmem:[%s6 + $0x40] sm:$0xff] %v324
  %341 = vst [vmem:[%s6 + $0x48] sm:$0xff] %v325
  %342 = vst [vmem:[%s6 + $0x50] sm:$0xff] %v326
  %343 = vst [vmem:[%s6 + $0x58] sm:$0xff] %v327
  %344 = vst [vmem:[%s6 + $0x60] sm:$0xff] %v328
  %345 = vst [vmem:[%s6 + $0x68] sm:$0xff] %v329
  %346 = vst [vmem:[%s6 + $0x70] sm:$0xff] %v330
  %347 = vst [vmem:[%s6 + $0x78] sm:$0xff] %v331
  // Predicated region
  $region30: #{memory_gcn_conv3.1} parent=0 // pred_check
    %p348 = pneg %p24
  $region31: #{memory_gcn_conv3.1} parent=0 // pred_check_branch
    %350 = sbr.rel (%p348) target = $region33
  $region32: #{memory_gcn_conv3.1} parent=0 // pred_region
    %v351 = vld [vmem:[%s2] sm:$0xf]
    %v352 = vld [vmem:[%s2 + $0x4] sm:$0xf]
    %v353 = vld [vmem:[%s2 + $0x8] sm:$0xf]
    %v354 = vld [vmem:[%s2 + $0xc] sm:$0xf]
    %v355 = vld [vmem:[%s2 + $0x10] sm:$0xf]
    %v356 = vld [vmem:[%s2 + $0x14] sm:$0xf]
    %v357 = vld [vmem:[%s2 + $0x18] sm:$0xf]
    %v358 = vld [vmem:[%s2 + $0x1c] sm:$0xf]
    %v359 = vld [vmem:[%s2 + $0x20] sm:$0xf]
    %v360 = vld [vmem:[%s2 + $0x24] sm:$0xf]
    %v361 = vld [vmem:[%s2 + $0x28] sm:$0xf]
    %v362 = vld [vmem:[%s2 + $0x2c] sm:$0xf]
    %v363 = vld [vmem:[%s2 + $0x30] sm:$0xf]
    %v364 = vld [vmem:[%s2 + $0x34] sm:$0xf]
    %v365 = vld [vmem:[%s2 + $0x38] sm:$0xf]
    %v366 = vld [vmem:[%s2 + $0x3c] sm:$0xf]
    %v367 = vld [vmem:[%s4] sm:$0xf]
    %v384 = vunpack.c.l.b16 %v351
    %v385 = vunpack.c.l.b16 %v352
    %v386 = vunpack.c.l.b16 %v353
    %v387 = vunpack.c.l.b16 %v354
    %v388 = vunpack.c.l.b16 %v355
    %v389 = vunpack.c.l.b16 %v356
    %v390 = vunpack.c.l.b16 %v357
    %v391 = vunpack.c.l.b16 %v358
    %v392 = vunpack.c.l.b16 %v359
    %v393 = vunpack.c.l.b16 %v360
    %v394 = vunpack.c.l.b16 %v361
    %v395 = vunpack.c.l.b16 %v362
    %v396 = vunpack.c.l.b16 %v363
    %v397 = vunpack.c.l.b16 %v364
    %v398 = vunpack.c.l.b16 %v365
    %v399 = vunpack.c.l.b16 %v366
    %v400 = vpack.c.b16 %v385, %v384
    %v401 = vpack.c.b16 %v387, %v386
    %v402 = vpack.c.b16 %v389, %v388
    %v403 = vpack.c.b16 %v391, %v390
    %v404 = vpack.c.b16 %v393, %v392
    %v405 = vpack.c.b16 %v395, %v394
    %v406 = vpack.c.b16 %v397, %v396
    %v407 = vpack.c.b16 %v399, %v398
    %v409 = vsel %vm101, %v400, 0
    %v412 = vsel %vm101, %v401, 0
    %v415 = vsel %vm101, %v402, 0
    %v418 = vsel %vm101, %v403, 0
    %v421 = vsel %vm101, %v404, 0
    %v424 = vsel %vm101, %v405, 0
    %v427 = vsel %vm101, %v406, 0
    %v430 = vsel %vm101, %v407, 0
    %v433 = vsel %vm126, %v367, 0
    %435 = vmatpush.bf16.msra.mxu0 0
    %436 = vmatpush.bf16.msra.mxu0 0
    %437 = vmatpush.bf16.msra.mxu0 0
    %438 = vmatpush.bf16.msra.mxu0 0
    %439 = vmatpush.bf16.msra.mxu0 0
    %440 = vmatpush.bf16.msra.mxu0 0
    %441 = vmatpush.bf16.msra.mxu0 0
    %442 = vmatpush.bf16.msra.mxu0 %v433
    %443 = vmatmul.bf16.gmra.mxu0 %v409
    %v444 = vpop.f32.mrf.mxu0
    %v445 = vadd.f32 0.0, %v444
    %v446 = vpop.f32.mrf.mxu0
    %v447 = vadd.f32 0.0, %v446
    %448 = vmatmul.bf16.gmra.mxu0 %v412
    %v449 = vpop.f32.mrf.mxu0
    %v450 = vadd.f32 0.0, %v449
    %v451 = vpop.f32.mrf.mxu0
    %v452 = vadd.f32 0.0, %v451
    %453 = vmatmul.bf16.gmra.mxu0 %v415
    %v454 = vpop.f32.mrf.mxu0
    %v455 = vadd.f32 0.0, %v454
    %v456 = vpop.f32.mrf.mxu0
    %v457 = vadd.f32 0.0, %v456
    %458 = vmatmul.bf16.gmra.mxu0 %v418
    %v459 = vpop.f32.mrf.mxu0
    %v460 = vadd.f32 0.0, %v459
    %v461 = vpop.f32.mrf.mxu0
    %v462 = vadd.f32 0.0, %v461
    %463 = vmatmul.bf16.gmra.mxu0 %v421
    %v464 = vpop.f32.mrf.mxu0
    %v465 = vadd.f32 0.0, %v464
    %v466 = vpop.f32.mrf.mxu0
    %v467 = vadd.f32 0.0, %v466
    %468 = vmatmul.bf16.gmra.mxu0 %v424
    %v469 = vpop.f32.mrf.mxu0
    %v470 = vadd.f32 0.0, %v469
    %v471 = vpop.f32.mrf.mxu0
    %v472 = vadd.f32 0.0, %v471
    %473 = vmatmul.bf16.gmra.mxu0 %v427
    %v474 = vpop.f32.mrf.mxu0
    %v475 = vadd.f32 0.0, %v474
    %v476 = vpop.f32.mrf.mxu0
    %v477 = vadd.f32 0.0, %v476
    %478 = vmatmul.bf16.gmra.mxu0 %v430
    %v479 = vpop.f32.mrf.mxu0
    %v480 = vadd.f32 0.0, %v479
    %v481 = vpop.f32.mrf.mxu0
    %v482 = vadd.f32 0.0, %v481
    %483 = vdwg.mxu0
    %vm484 = vcmp.ge.f32.partialorder %v445, 0.0
    %vm485 = vcmp.ge.f32.partialorder %v447, 0.0
    %vm486 = vcmp.ge.f32.partialorder %v450, 0.0
    %vm487 = vcmp.ge.f32.partialorder %v452, 0.0
    %vm488 = vcmp.ge.f32.partialorder %v455, 0.0
    %vm489 = vcmp.ge.f32.partialorder %v457, 0.0
    %vm490 = vcmp.ge.f32.partialorder %v460, 0.0
    %vm491 = vcmp.ge.f32.partialorder %v462, 0.0
    %vm492 = vcmp.ge.f32.partialorder %v465, 0.0
    %vm493 = vcmp.ge.f32.partialorder %v467, 0.0
    %vm494 = vcmp.ge.f32.partialorder %v470, 0.0
    %vm495 = vcmp.ge.f32.partialorder %v472, 0.0
    %vm496 = vcmp.ge.f32.partialorder %v475, 0.0
    %vm497 = vcmp.ge.f32.partialorder %v477, 0.0
    %vm498 = vcmp.ge.f32.partialorder %v480, 0.0
    %vm499 = vcmp.ge.f32.partialorder %v482, 0.0
    %v500 = vmul.f32 %v445, 0.01
    %v501 = vmul.f32 %v447, 0.01
    %v502 = vmul.f32 %v450, 0.01
    %v503 = vmul.f32 %v452, 0.01
    %v504 = vmul.f32 %v455, 0.01
    %v505 = vmul.f32 %v457, 0.01
    %v506 = vmul.f32 %v460, 0.01
    %v507 = vmul.f32 %v462, 0.01
    %v508 = vmul.f32 %v465, 0.01
    %v509 = vmul.f32 %v467, 0.01
    %v510 = vmul.f32 %v470, 0.01
    %v511 = vmul.f32 %v472, 0.01
    %v512 = vmul.f32 %v475, 0.01
    %v513 = vmul.f32 %v477, 0.01
    %v514 = vmul.f32 %v480, 0.01
    %v515 = vmul.f32 %v482, 0.01
    %v516 = vsel %vm484, %v445, %v500
    %v517 = vsel %vm485, %v447, %v501
    %v518 = vsel %vm486, %v450, %v502
    %v519 = vsel %vm487, %v452, %v503
    %v520 = vsel %vm488, %v455, %v504
    %v521 = vsel %vm489, %v457, %v505
    %v522 = vsel %vm490, %v460, %v506
    %v523 = vsel %vm491, %v462, %v507
    %v524 = vsel %vm492, %v465, %v508
    %v525 = vsel %vm493, %v467, %v509
    %v526 = vsel %vm494, %v470, %v510
    %v527 = vsel %vm495, %v472, %v511
    %v528 = vsel %vm496, %v475, %v512
    %v529 = vsel %vm497, %v477, %v513
    %v530 = vsel %vm498, %v480, %v514
    %v531 = vsel %vm499, %v482, %v515
    %v532 = vld [vmem:[%s6] sm:$0xff]
    %v533 = vld [vmem:[%s6 + $0x8] sm:$0xff]
    %v534 = vld [vmem:[%s6 + $0x10] sm:$0xff]
    %v535 = vld [vmem:[%s6 + $0x18] sm:$0xff]
    %v536 = vld [vmem:[%s6 + $0x20] sm:$0xff]
    %v537 = vld [vmem:[%s6 + $0x28] sm:$0xff]
    %v538 = vld [vmem:[%s6 + $0x30] sm:$0xff]
    %v539 = vld [vmem:[%s6 + $0x38] sm:$0xff]
    %v540 = vld [vmem:[%s6 + $0x40] sm:$0xff]
    %v541 = vld [vmem:[%s6 + $0x48] sm:$0xff]
    %v542 = vld [vmem:[%s6 + $0x50] sm:$0xff]
    %v543 = vld [vmem:[%s6 + $0x58] sm:$0xff]
    %v544 = vld [vmem:[%s6 + $0x60] sm:$0xff]
    %v545 = vld [vmem:[%s6 + $0x68] sm:$0xff]
    %v546 = vld [vmem:[%s6 + $0x70] sm:$0xff]
    %v547 = vld [vmem:[%s6 + $0x78] sm:$0xff]
    %v548 = vadd.f32 %v532, %v516
    %v549 = vadd.f32 %v533, %v517
    %v550 = vadd.f32 %v534, %v518
    %v551 = vadd.f32 %v535, %v519
    %v552 = vadd.f32 %v536, %v520
    %v553 = vadd.f32 %v537, %v521
    %v554 = vadd.f32 %v538, %v522
    %v555 = vadd.f32 %v539, %v523
    %v556 = vadd.f32 %v540, %v524
    %v557 = vadd.f32 %v541, %v525
    %v558 = vadd.f32 %v542, %v526
    %v559 = vadd.f32 %v543, %v527
    %v560 = vadd.f32 %v544, %v528
    %v561 = vadd.f32 %v545, %v529
    %v562 = vadd.f32 %v546, %v530
    %v563 = vadd.f32 %v547, %v531
    %v564 = vld [vmem:[%s5] sm:$0x1]
    %v566 = vperm.slane %v564, 0
    %v568 = vadd.f32 %v548, %v566
    %v569 = vadd.f32 %v549, %v566
    %v570 = vadd.f32 %v550, %v566
    %v571 = vadd.f32 %v551, %v566
    %v572 = vadd.f32 %v552, %v566
    %v573 = vadd.f32 %v553, %v566
    %v574 = vadd.f32 %v554, %v566
    %v575 = vadd.f32 %v555, %v566
    %v576 = vadd.f32 %v556, %v566
    %v577 = vadd.f32 %v557, %v566
    %v578 = vadd.f32 %v558, %v566
    %v579 = vadd.f32 %v559, %v566
    %v580 = vadd.f32 %v560, %v566
    %v581 = vadd.f32 %v561, %v566
    %v582 = vadd.f32 %v562, %v566
    %v583 = vadd.f32 %v563, %v566
    %v584 = vmax.f32 %v568, 0.0
    %v585 = vmax.f32 %v569, 0.0
    %v586 = vmax.f32 %v570, 0.0
    %v587 = vmax.f32 %v571, 0.0
    %v588 = vmax.f32 %v572, 0.0
    %v589 = vmax.f32 %v573, 0.0
    %v590 = vmax.f32 %v574, 0.0
    %v591 = vmax.f32 %v575, 0.0
    %v592 = vmax.f32 %v576, 0.0
    %v593 = vmax.f32 %v577, 0.0
    %v594 = vmax.f32 %v578, 0.0
    %v595 = vmax.f32 %v579, 0.0
    %v596 = vmax.f32 %v580, 0.0
    %v597 = vmax.f32 %v581, 0.0
    %v598 = vmax.f32 %v582, 0.0
    %v599 = vmax.f32 %v583, 0.0
    %v600 = vmul.f32 %v584, %v584
    %v601 = vmul.f32 %v585, %v585
    %v602 = vmul.f32 %v586, %v586
    %v603 = vmul.f32 %v587, %v587
    %v604 = vmul.f32 %v588, %v588
    %v605 = vmul.f32 %v589, %v589
    %v606 = vmul.f32 %v590, %v590
    %v607 = vmul.f32 %v591, %v591
    %v608 = vmul.f32 %v592, %v592
    %v609 = vmul.f32 %v593, %v593
    %v610 = vmul.f32 %v594, %v594
    %v611 = vmul.f32 %v595, %v595
    %v612 = vmul.f32 %v596, %v596
    %v613 = vmul.f32 %v597, %v597
    %v614 = vmul.f32 %v598, %v598
    %v615 = vmul.f32 %v599, %v599
    %616 = vadd.xlane.f32.xlu0 %v600
    %v617 = vpop.xlane.xlu0 %616
    %618 = vadd.xlane.f32.xlu0 %v601
    %v619 = vpop.xlane.xlu0 %618
    %620 = vadd.xlane.f32.xlu0 %v602
    %v621 = vpop.xlane.xlu0 %620
    %622 = vadd.xlane.f32.xlu0 %v603
    %v623 = vpop.xlane.xlu0 %622
    %624 = vadd.xlane.f32.xlu0 %v604
    %v625 = vpop.xlane.xlu0 %624
    %626 = vadd.xlane.f32.xlu0 %v605
    %v627 = vpop.xlane.xlu0 %626
    %628 = vadd.xlane.f32.xlu0 %v606
    %v629 = vpop.xlane.xlu0 %628
    %630 = vadd.xlane.f32.xlu0 %v607
    %v631 = vpop.xlane.xlu0 %630
    %632 = vadd.xlane.f32.xlu0 %v608
    %v633 = vpop.xlane.xlu0 %632
    %634 = vadd.xlane.f32.xlu0 %v609
    %v635 = vpop.xlane.xlu0 %634
    %636 = vadd.xlane.f32.xlu0 %v610
    %v637 = vpop.xlane.xlu0 %636
    %638 = vadd.xlane.f32.xlu0 %v611
    %v639 = vpop.xlane.xlu0 %638
    %640 = vadd.xlane.f32.xlu0 %v612
    %v641 = vpop.xlane.xlu0 %640
    %642 = vadd.xlane.f32.xlu0 %v613
    %v643 = vpop.xlane.xlu0 %642
    %644 = vadd.xlane.f32.xlu0 %v614
    %v645 = vpop.xlane.xlu0 %644
    %646 = vadd.xlane.f32.xlu0 %v615
    %v647 = vpop.xlane.xlu0 %646
    %v648 = vmax.f32 %v617, 1e-24
    %v649 = vmax.f32 %v619, 1e-24
    %v650 = vmax.f32 %v621, 1e-24
    %v651 = vmax.f32 %v623, 1e-24
    %v652 = vmax.f32 %v625, 1e-24
    %v653 = vmax.f32 %v627, 1e-24
    %v654 = vmax.f32 %v629, 1e-24
    %v655 = vmax.f32 %v631, 1e-24
    %v656 = vmax.f32 %v633, 1e-24
    %v657 = vmax.f32 %v635, 1e-24
    %v658 = vmax.f32 %v637, 1e-24
    %v659 = vmax.f32 %v639, 1e-24
    %v660 = vmax.f32 %v641, 1e-24
    %v661 = vmax.f32 %v643, 1e-24
    %v662 = vmax.f32 %v645, 1e-24
    %v663 = vmax.f32 %v647, 1e-24
    %v664 = vrsqrt.pop %v648
    %v665 = vmul.f32 %v664, %v648
    %v666 = vmul.f32 %v665, %v664
    %v667 = vmul.f32 0.5, %v666
    %v668 = vsub.f32 1.5, %v667
    %v669 = vmul.f32 %v664, %v668
    %vm670 = vweird.f32 %v648
    %vm671 = vweird.f32 %v664
    %vm672 = vmor %vm670, %vm671
    %v673 = vsel %vm672, %v664, %v669
    %v674 = vrsqrt.pop %v649
    %v675 = vmul.f32 %v674, %v649
    %v676 = vmul.f32 %v675, %v674
    %v677 = vmul.f32 0.5, %v676
    %v678 = vsub.f32 1.5, %v677
    %v679 = vmul.f32 %v674, %v678
    %vm680 = vweird.f32 %v649
    %vm681 = vweird.f32 %v674
    %vm682 = vmor %vm680, %vm681
    %v683 = vsel %vm682, %v674, %v679
    %v684 = vrsqrt.pop %v650
    %v685 = vmul.f32 %v684, %v650
    %v686 = vmul.f32 %v685, %v684
    %v687 = vmul.f32 0.5, %v686
    %v688 = vsub.f32 1.5, %v687
    %v689 = vmul.f32 %v684, %v688
    %vm690 = vweird.f32 %v650
    %vm691 = vweird.f32 %v684
    %vm692 = vmor %vm690, %vm691
    %v693 = vsel %vm692, %v684, %v689
    %v694 = vrsqrt.pop %v651
    %v695 = vmul.f32 %v694, %v651
    %v696 = vmul.f32 %v695, %v694
    %v697 = vmul.f32 0.5, %v696
    %v698 = vsub.f32 1.5, %v697
    %v699 = vmul.f32 %v694, %v698
    %vm700 = vweird.f32 %v651
    %vm701 = vweird.f32 %v694
    %vm702 = vmor %vm700, %vm701
    %v703 = vsel %vm702, %v694, %v699
    %v704 = vrsqrt.pop %v652
    %v705 = vmul.f32 %v704, %v652
    %v706 = vmul.f32 %v705, %v704
    %v707 = vmul.f32 0.5, %v706
    %v708 = vsub.f32 1.5, %v707
    %v709 = vmul.f32 %v704, %v708
    %vm710 = vweird.f32 %v652
    %vm711 = vweird.f32 %v704
    %vm712 = vmor %vm710, %vm711
    %v713 = vsel %vm712, %v704, %v709
    %v714 = vrsqrt.pop %v653
    %v715 = vmul.f32 %v714, %v653
    %v716 = vmul.f32 %v715, %v714
    %v717 = vmul.f32 0.5, %v716
    %v718 = vsub.f32 1.5, %v717
    %v719 = vmul.f32 %v714, %v718
    %vm720 = vweird.f32 %v653
    %vm721 = vweird.f32 %v714
    %vm722 = vmor %vm720, %vm721
    %v723 = vsel %vm722, %v714, %v719
    %v724 = vrsqrt.pop %v654
    %v725 = vmul.f32 %v724, %v654
    %v726 = vmul.f32 %v725, %v724
    %v727 = vmul.f32 0.5, %v726
    %v728 = vsub.f32 1.5, %v727
    %v729 = vmul.f32 %v724, %v728
    %vm730 = vweird.f32 %v654
    %vm731 = vweird.f32 %v724
    %vm732 = vmor %vm730, %vm731
    %v733 = vsel %vm732, %v724, %v729
    %v734 = vrsqrt.pop %v655
    %v735 = vmul.f32 %v734, %v655
    %v736 = vmul.f32 %v735, %v734
    %v737 = vmul.f32 0.5, %v736
    %v738 = vsub.f32 1.5, %v737
    %v739 = vmul.f32 %v734, %v738
    %vm740 = vweird.f32 %v655
    %vm741 = vweird.f32 %v734
    %vm742 = vmor %vm740, %vm741
    %v743 = vsel %vm742, %v734, %v739
    %v744 = vrsqrt.pop %v656
    %v745 = vmul.f32 %v744, %v656
    %v746 = vmul.f32 %v745, %v744
    %v747 = vmul.f32 0.5, %v746
    %v748 = vsub.f32 1.5, %v747
    %v749 = vmul.f32 %v744, %v748
    %vm750 = vweird.f32 %v656
    %vm751 = vweird.f32 %v744
    %vm752 = vmor %vm750, %vm751
    %v753 = vsel %vm752, %v744, %v749
    %v754 = vrsqrt.pop %v657
    %v755 = vmul.f32 %v754, %v657
    %v756 = vmul.f32 %v755, %v754
    %v757 = vmul.f32 0.5, %v756
    %v758 = vsub.f32 1.5, %v757
    %v759 = vmul.f32 %v754, %v758
    %vm760 = vweird.f32 %v657
    %vm761 = vweird.f32 %v754
    %vm762 = vmor %vm760, %vm761
    %v763 = vsel %vm762, %v754, %v759
    %v764 = vrsqrt.pop %v658
    %v765 = vmul.f32 %v764, %v658
    %v766 = vmul.f32 %v765, %v764
    %v767 = vmul.f32 0.5, %v766
    %v768 = vsub.f32 1.5, %v767
    %v769 = vmul.f32 %v764, %v768
    %vm770 = vweird.f32 %v658
    %vm771 = vweird.f32 %v764
    %vm772 = vmor %vm770, %vm771
    %v773 = vsel %vm772, %v764, %v769
    %v774 = vrsqrt.pop %v659
    %v775 = vmul.f32 %v774, %v659
    %v776 = vmul.f32 %v775, %v774
    %v777 = vmul.f32 0.5, %v776
    %v778 = vsub.f32 1.5, %v777
    %v779 = vmul.f32 %v774, %v778
    %vm780 = vweird.f32 %v659
    %vm781 = vweird.f32 %v774
    %vm782 = vmor %vm780, %vm781
    %v783 = vsel %vm782, %v774, %v779
    %v784 = vrsqrt.pop %v660
    %v785 = vmul.f32 %v784, %v660
    %v786 = vmul.f32 %v785, %v784
    %v787 = vmul.f32 0.5, %v786
    %v788 = vsub.f32 1.5, %v787
    %v789 = vmul.f32 %v784, %v788
    %vm790 = vweird.f32 %v660
    %vm791 = vweird.f32 %v784
    %vm792 = vmor %vm790, %vm791
    %v793 = vsel %vm792, %v784, %v789
    %v794 = vrsqrt.pop %v661
    %v795 = vmul.f32 %v794, %v661
    %v796 = vmul.f32 %v795, %v794
    %v797 = vmul.f32 0.5, %v796
    %v798 = vsub.f32 1.5, %v797
    %v799 = vmul.f32 %v794, %v798
    %vm800 = vweird.f32 %v661
    %vm801 = vweird.f32 %v794
    %vm802 = vmor %vm800, %vm801
    %v803 = vsel %vm802, %v794, %v799
    %v804 = vrsqrt.pop %v662
    %v805 = vmul.f32 %v804, %v662
    %v806 = vmul.f32 %v805, %v804
    %v807 = vmul.f32 0.5, %v806
    %v808 = vsub.f32 1.5, %v807
    %v809 = vmul.f32 %v804, %v808
    %vm810 = vweird.f32 %v662
    %vm811 = vweird.f32 %v804
    %vm812 = vmor %vm810, %vm811
    %v813 = vsel %vm812, %v804, %v809
    %v814 = vrsqrt.pop %v663
    %v815 = vmul.f32 %v814, %v663
    %v816 = vmul.f32 %v815, %v814
    %v817 = vmul.f32 0.5, %v816
    %v818 = vsub.f32 1.5, %v817
    %v819 = vmul.f32 %v814, %v818
    %vm820 = vweird.f32 %v663
    %vm821 = vweird.f32 %v814
    %vm822 = vmor %vm820, %vm821
    %v823 = vsel %vm822, %v814, %v819
    %v824 = vmul.f32 %v584, %v673
    %v825 = vmul.f32 %v585, %v683
    %v826 = vmul.f32 %v586, %v693
    %v827 = vmul.f32 %v587, %v703
    %v828 = vmul.f32 %v588, %v713
    %v829 = vmul.f32 %v589, %v723
    %v830 = vmul.f32 %v590, %v733
    %v831 = vmul.f32 %v591, %v743
    %v832 = vmul.f32 %v592, %v753
    %v833 = vmul.f32 %v593, %v763
    %v834 = vmul.f32 %v594, %v773
    %v835 = vmul.f32 %v595, %v783
    %v836 = vmul.f32 %v596, %v793
    %v837 = vmul.f32 %v597, %v803
    %v838 = vmul.f32 %v598, %v813
    %v839 = vmul.f32 %v599, %v823
    %840 = vst [vmem:[%s6] sm:$0xff] %v824
    %841 = vst [vmem:[%s6 + $0x8] sm:$0xff] %v825
    %842 = vst [vmem:[%s6 + $0x10] sm:$0xff] %v826
    %843 = vst [vmem:[%s6 + $0x18] sm:$0xff] %v827
    %844 = vst [vmem:[%s6 + $0x20] sm:$0xff] %v828
    %845 = vst [vmem:[%s6 + $0x28] sm:$0xff] %v829
    %846 = vst [vmem:[%s6 + $0x30] sm:$0xff] %v830
    %847 = vst [vmem:[%s6 + $0x38] sm:$0xff] %v831
    %848 = vst [vmem:[%s6 + $0x40] sm:$0xff] %v832
    %849 = vst [vmem:[%s6 + $0x48] sm:$0xff] %v833
    %850 = vst [vmem:[%s6 + $0x50] sm:$0xff] %v834
    %851 = vst [vmem:[%s6 + $0x58] sm:$0xff] %v835
    %852 = vst [vmem:[%s6 + $0x60] sm:$0xff] %v836
    %853 = vst [vmem:[%s6 + $0x68] sm:$0xff] %v837
    %854 = vst [vmem:[%s6 + $0x70] sm:$0xff] %v838
    %855 = vst [vmem:[%s6 + $0x78] sm:$0xff] %v839
  $region33: #{memory_gcn_conv3.1} parent=0 // pred_fallthru
    _
  // Predicated region
  $region34: #{memory_gcn_conv3.1} parent=0 // pred_check
    _
  $region35: #{memory_gcn_conv3.1} parent=0 // pred_check_branch
    %857 = sbr.rel (0) target = $region37
  $region36: #{memory_gcn_conv3.1} parent=0 // pred_region
    _
  $region37: #{memory_gcn_conv3.1} parent=0 // pred_fallthru
    _
  // Predicated region
  $region38: #{memory_gcn_conv3.1} parent=0 // pred_check
    _
  $region39: #{memory_gcn_conv3.1} parent=0 // pred_check_branch
    %859 = sbr.rel (0) target = $region41
  $region40: #{memory_gcn_conv3.1} parent=0 // pred_region
    _
  $region41: #{memory_gcn_conv3.1} parent=0 // pred_fallthru
    _

</llo_original>
